<compile_context>
chip_gen: v7x
topology: tpu7x:2x2x1
jax: 0.10.0
libtpu: 0.0.40
codegen_flags: <defaults>
</compile_context>

<pallas_src>
import numpy as np
import jax
import jax.numpy as jnp
from jax.experimental import pallas as pl
from jax.experimental.pallas import tpu as pltpu


def _source_channel_map(C, input_size, permutation):
    """src[o] = input channel read by output channel o (static)."""
    return (np.arange(C, dtype=np.int64)
              .reshape(input_size)
              .transpose(permutation)
              .reshape(-1))


def _make_mxu_permute_kernel(precision):
    """Permute channels via one-hot matmul on the MXU (preferred path)."""
    def kernel(p_ref, x_ref, o_ref):
        # p_ref: (C, C) one-hot permutation; x_ref/o_ref: (1, C, hw_tile).
        y = jnp.dot(p_ref[...], x_ref[0].astype(p_ref.dtype),
                    preferred_element_type=jnp.float32,
                    precision=precision)
        o_ref[0] = y.astype(o_ref.dtype)
    return kernel


def _make_strided_copy_kernel(runs, run_len, stride):
    """Fallback (non-float dtypes): dense multi-row stores, strided loads.

    runs: list of (out_channel_start, src_channel_start); within a run the
    source channels are src_start + k*stride for k in range(run_len).
    """
    def kernel(x_ref, o_ref):
        for out_start, src_start in runs:
            if stride == 1:
                src = x_ref[:, src_start:src_start + run_len, :]
            else:
                src = x_ref[:, pl.ds(src_start, run_len, stride=stride), :]
            o_ref[:, out_start:out_start + run_len, :] = src
    return kernel


def shuffle_cell(x, cell_info):
    """Pallas implementation of ShuffleCell.forward for NCHW inputs, dim=1."""
    dim = cell_info['dim']
    input_size = list(cell_info['input_size'])
    permutation = list(cell_info['permutation'])
    assert x.ndim == 4 and dim == 1, "kernel specialized to NCHW channel shuffle (dim=1)"
    B, C, H, W = x.shape
    assert int(np.prod(input_size)) == C

    src = _source_channel_map(C, input_size, permutation)

    HW = H * W
    itemsize = jnp.dtype(x.dtype).itemsize

    # Lane-dense tiling: pad HW up to a multiple of 128, pick the tile from a
    # per-block byte budget, then ceil-div (padding the tail tile in the
    # wrapper so every block is full and every store is unmasked).
    hw_pad128 = ((HW + 127) // 128) * 128
    block_budget_bytes = 6 * 1024 * 1024        # 4 double-buffered blocks ~ 24 MiB
    budget_lanes = max(128, (block_budget_bytes // max(1, C * itemsize)) // 128 * 128)
    hw_tile = int(min(hw_pad128, budget_lanes))
    num_hw_tiles = int(pl.cdiv(hw_pad128, hw_tile))
    HW_total = num_hw_tiles * hw_tile
    # TODO(synk): for very large C the block may exceed the budget at the
    # 128-lane floor; add channel tiling (grid axis over C groups) if needed.

    x_flat = x.reshape(B, C, HW)
    if HW_total != HW:
        x_flat = jnp.pad(x_flat, ((0, 0), (0, 0), (0, HW_total - HW)))

    cost = pl.CostEstimate(flops=0, transcendentals=0,
                           bytes_accessed=2 * B * C * HW_total * itemsize)
    cparams = pltpu.CompilerParams(
        dimension_semantics=("parallel", "parallel"),
        vmem_limit_bytes=48 * 1024 * 1024)

    use_mxu = bool(jnp.issubdtype(x.dtype, jnp.floating)) and C <= 1024
    if use_mxu:
        # One-hot permutation matrix. bf16 keeps native MXU rate (0/1 exact);
        # other float dtypes go through f32 with HIGHEST precision (exact).
        perm_dtype = jnp.bfloat16 if x.dtype == jnp.bfloat16 else jnp.float32
        precision = (jax.lax.Precision.DEFAULT if perm_dtype == jnp.bfloat16
                     else jax.lax.Precision.HIGHEST)
        P_np = np.zeros((C, C), dtype=np.float32)
        P_np[np.arange(C), src] = 1.0
        P = jnp.asarray(P_np, dtype=perm_dtype)

        out_flat = pl.pallas_call(
            _make_mxu_permute_kernel(precision),
            out_shape=jax.ShapeDtypeStruct((B, C, HW_total), x.dtype),
            grid=(B, num_hw_tiles),
            in_specs=[pl.BlockSpec((C, C), lambda b, t: (0, 0)),
                      pl.BlockSpec((1, C, hw_tile), lambda b, t: (b, 0, t))],
            out_specs=pl.BlockSpec((1, C, hw_tile), lambda b, t: (b, 0, t)),
            compiler_params=cparams,
            cost_estimate=cost,
        )(P, x_flat)
    else:
        # Outer-factor block copies: consecutive output channels (the last
        # permuted axis varying fastest) read sources in an arithmetic
        # progression with the original stride of that axis.
        a = permutation[-1]
        run_len = input_size[a]
        stride = int(np.prod(input_size[a + 1:])) if a + 1 < len(input_size) else 1
        runs = [(r * run_len, int(src[r * run_len])) for r in range(C // run_len)]
        kernel = _make_strided_copy_kernel(runs, run_len, stride)

        out_flat = pl.pallas_call(
            kernel,
            out_shape=jax.ShapeDtypeStruct((B, C, HW_total), x.dtype),
            grid=(B, num_hw_tiles),
            in_specs=[pl.BlockSpec((1, C, hw_tile), lambda b, t: (b, 0, t))],
            out_specs=pl.BlockSpec((1, C, hw_tile), lambda b, t: (b, 0, t)),
            compiler_params=cparams,
            cost_estimate=cost,
        )(x_flat)

    if HW_total != HW:
        out_flat = out_flat[:, :, :HW]
    return out_flat.reshape(B, C, H, W)


def shuffle_cell_ref(x, cell_info):
    """Pure-JAX reference mirroring the PyTorch forward exactly."""
    dim = cell_info['dim']
    input_size = list(cell_info['input_size'])
    perm = list(cell_info['permutation'])
    sz = list(x.shape)
    new_shape = sz[:dim] + input_size + sz[dim + 1:]
    full_perm = (list(range(dim))
                 + [p + dim for p in perm]
                 + [i + dim + len(input_size) for i in range(len(sz) - dim - 1)])
    out_shape = sz[:dim] + [-1] + sz[dim + 1:]
    return x.reshape(new_shape).transpose(full_perm).reshape(out_shape)


if __name__ == "__main__":
    # ShuffleCell has no trainable parameters; only static cell_info config.
    cell_info = {'dim': 1, 'input_size': [2, 2], 'permutation': [1, 0]}

    key = jax.random.PRNGKey(0)
    x = jax.random.normal(key, (2, 4, 16, 16), dtype=jnp.float32)

    out = shuffle_cell(x, cell_info)
    out = jax.block_until_ready(out)

    ref = shuffle_cell_ref(x, cell_info)
    assert out.shape == ref.shape, (out.shape, ref.shape)
    # One-hot f32 MXU matmul at HIGHEST precision is exact; tight tolerance
    # still guards against any last-bit platform quirk.
    assert jnp.allclose(out, ref, rtol=1e-6, atol=1e-6), \
        "Pallas shuffle does not match reference"

    print("KERNEL_OK")
</pallas_src>

<mosaic_0001>
module attributes {stable_mosaic.version = 11 : i64} {
  func.func @kernel(%arg0: i32, %arg1: i32, %arg2: memref<4x4xf32, #tpu.memory_space<vmem>>, %arg3: memref<1x4x256xf32, #tpu.memory_space<vmem>>, %arg4: memref<1x4x256xf32, #tpu.memory_space<vmem>>) attributes {dimension_semantics = [#tpu.dimension_semantics<parallel>, #tpu.dimension_semantics<parallel>], iteration_bounds = array<i64: 2, 1>, scalar_prefetch = 0 : i64, scratch_operands = 0 : i64, tpu.core_type = #tpu.core_type<tc>, window_params = [{pipeline_mode = #tpu.pipeline_mode<synchronous>, transform_indices = @transform_0, window_bounds = array<i64: 4, 4>}, {transform_indices = @transform_1, window_bounds = array<i64: 1, 4, 256>}, {transform_indices = @transform_2, window_bounds = array<i64: 1, 4, 256>}]} {
    %c0 = arith.constant 0 : index
    %c0_0 = arith.constant 0 : index
    %0 = vector.load %arg2[%c0, %c0_0] : memref<4x4xf32, #tpu.memory_space<vmem>>, vector<4x4xf32>
    %c0_1 = arith.constant 0 : index
    %c0_2 = arith.constant 0 : index
    %c0_3 = arith.constant 0 : index
    %1 = vector.load %arg3[%c0_1, %c0_2, %c0_3] : memref<1x4x256xf32, #tpu.memory_space<vmem>>, vector<1x4x256xf32>
    %2 = vector.shape_cast %1 : vector<1x4x256xf32> to vector<4x256xf32>
    %cst = arith.constant dense<0.000000e+00> : vector<4x256xf32>
    %3 = tpu.matmul %0, %2, %cst {dimension_numbers = #tpu.dot_dimension_numbers<[1], [0], [0], [1], [0, 0, 1, 1], [], []>, precision = #tpu.contract_precision<fp32>} : vector<4x4xf32>, vector<4x256xf32>, vector<4x256xf32> -> vector<4x256xf32>
    %c0_4 = arith.constant 0 : index
    %c0_5 = arith.constant 0 : index
    %c0_6 = arith.constant 0 : index
    %4 = vector.load %arg4[%c0_4, %c0_5, %c0_6] : memref<1x4x256xf32, #tpu.memory_space<vmem>>, vector<1x4x256xf32>
    %5 = vector.shape_cast %4 : vector<1x4x256xf32> to vector<4x256xf32>
    %6 = vector.shape_cast %3 : vector<4x256xf32> to vector<1x4x256xf32>
    tpu.vector_store %arg4[%c0_4, %c0_5, %c0_6], %6 {strides = array<i32>} : memref<1x4x256xf32, #tpu.memory_space<vmem>>, vector<1x4x256xf32>,
    return
  }
  func.func @transform_0(%arg0: i32, %arg1: i32) -> (i32, i32) {
    %c0_i32 = arith.constant 0 : i32
    %c0_i32_0 = arith.constant 0 : i32
    %c0_i32_1 = arith.constant 0 : i32
    return %c0_i32, %c0_i32_0 : i32, i32
  }
  func.func @transform_1(%arg0: i32, %arg1: i32) -> (i32, i32, i32) {
    %c0_i32 = arith.constant 0 : i32
    %c0_i32_0 = arith.constant 0 : i32
    return %arg0, %c0_i32, %arg1 : i32, i32, i32
  }
  func.func @transform_2(%arg0: i32, %arg1: i32) -> (i32, i32, i32) {
    %c0_i32 = arith.constant 0 : i32
    %c0_i32_0 = arith.constant 0 : i32
    return %arg0, %c0_i32, %arg1 : i32, i32, i32
  }
}

</mosaic_0001>

<llo_original>
// kernel: tpu_custom_call.1
$region0: #{tpu_custom_call.1}
  #allocation0 [shape = 'u32[]', space=smem, size = 0x4, offset = 0x4, fixed_abs, tag = 'smem constant byte address 0x4 - core index']
  #allocation1 [shape = 'u32[144,128]{1,0:T(1,128)}', space=vmem, size = 0x12000, scoped, tag = 'internal scratch']
  %s0 = inlined_call_operand.hbm [shape: f32[4,4], index: 0, kind: input, shape index: {}]
  %s1 = inlined_call_operand.hbm [shape: f32[2,4,256], index: 1, kind: input, shape index: {}]
  %s2 = inlined_call_operand.hbm [shape: f32[2,4,256], index: 2, kind: output, shape index: {}]
  %s3 = sld [smem:[#allocation0]]
  $region49: #{tpu_custom_call.1} parent=0
    _
  %s5 = ssub.s32 1, %s3
  %s6 = scalar_select 0, %s5, %s3
  $region1: #{tpu_custom_call.1} parent=0
    #allocation2 [shape = 'u8[2048]{0}', space=vmem, size = 0x800, scoped, tag = 'input window, operand 0, single buffered']
    #allocation3 [shape = 's32[2]{0}', space=sflag, size = 0x8, scoped, tag = 'scoped memory for tpu_custom_call.1']
    #allocation4 [shape = 's32[2]{0}', space=sflag, size = 0x8, scoped, tag = 'scoped memory for tpu_custom_call.1']
    #allocation5 [shape = 'u8[8192]{0}', space=vmem, size = 0x2000, scoped, tag = 'input window, operand 1']
    #allocation6 [shape = 's32[2]{0}', space=sflag, size = 0x8, scoped, tag = 'scoped memory for tpu_custom_call.1']
    #allocation7 [shape = 'u8[8192]{0}', space=vmem, size = 0x2000, scoped, tag = 'output window, operand 0']
    %7 = vsyncpa [#allocation3], 0
    %8 = vsyncpa [#allocation6], 0
    %s9 = scalar_lea.sflag [#allocation6], 1
    %10 = vsyncpa %s9, 0
    %11 = vsyncpa [#allocation4], 0
    %s12 = scalar_lea.sflag [#allocation4], 1
    %13 = vsyncpa %s12, 0
    loop: start=0, step=1, limit=4
    $region2: #{tpu_custom_call.1} parent=1 // loop_pre_header
      _
    $region3: #{tpu_custom_call.1} parent=1 // loop_header
      %s15 = sphi 0, %s19
      %p16 = scmp.ge.s32.totalorder %s15, 4
      %s22 = sphi 0, %s34
      %s23 = sphi 0, %s30
      %s24 = sphi 0, %s22
      %s25 = sphi 0, %s23
      %s26 = sphi 0, %s24
      %s27 = sphi 0, %s25
      %s35 = sphi 0, %s35
      %s37 = sphi 0, %s35
      %s38 = sphi 0, %s37
      %s52 = sphi 0, %s38
      %s60 = sphi 0, %s62
      %s63 = sphi 0, %s60
      %s64 = sphi 0, %s63
      %s80 = sphi 0, %s64
      %s88 = sphi 0, %s90
      %s91 = sphi 0, %s88
      %s92 = sphi 0, %s91
      %s108 = sphi 0, %s92
    $region4: #{tpu_custom_call.1} parent=1 // loop_header_branch
      %18 = sbr.rel (%p16) target = $region8
    $region5: #{tpu_custom_call.1} parent=1 // loop_body
      %s20 = ssub.s32 %s15, 1
      %s21 = ssub.s32 %s15, 2
      %s28 = sadd.s32 1, %s23
      %p29 = scmp.ge.s32.totalorder %s28, 1
      %s30 = scalar_select %p29, 0, %s28
      %s31 = sadd.s32 1, %s22
      %s32 = scalar_select %p29, %s31, %s22
      %p33 = scmp.ge.s32.totalorder %s32, 2
      %s34 = scalar_select %p33, 0, %s32
      %s36 = sadd.s32 %s35, 1
      %p39 = scmp.eq.s32.totalorder %s15, 1
      %p40 = scmp.ne.s32.totalorder %s35, %s37
      %p41 = scmp.eq.s32.totalorder %s15, 0
      %p42 = por %p40, %p41
      %p43 = scmp.ne.s32.totalorder %s35, %s37
      %p44 = scmp.eq.s32.totalorder %s20, 1
      %p45 = por %p43, %p44
      %p46 = scmp.ne.s32.totalorder %s37, %s38
      %p47 = scmp.eq.s32.totalorder %s20, 0
      %p48 = por %p46, %p47
      %p49 = scmp.ne.s32.totalorder %s37, %s38
      %p50 = scmp.eq.s32.totalorder %s21, 1
      %p51 = por %p49, %p50
      %p53 = scmp.ne.s32.totalorder %s38, %s52
      %p54 = scmp.eq.s32.totalorder %s21, 0
      %p55 = por %p53, %p54
      %s56 = ssub.s32 %s22, %s34
      %s57 = ssub.s32 %s23, %s30
      %s58 = sor.u32 %s56, %s57
      %p59 = scmp.eq.s32.totalorder %s58, 0
      %s61 = sadd.s32 %s60, 1
      %s62 = scalar_select %p59, %s60, %s61
      %p65 = pneg %p59
      %p66 = scmp.eq.s32.totalorder %s15, 1
      %p67 = por %p65, %p66
      %p68 = scmp.ne.s32.totalorder %s60, %s63
      %p69 = scmp.eq.s32.totalorder %s15, 0
      %p70 = por %p68, %p69
      %p71 = scmp.ne.s32.totalorder %s60, %s63
      %p72 = scmp.eq.s32.totalorder %s20, 1
      %p73 = por %p71, %p72
      %p74 = scmp.ne.s32.totalorder %s63, %s64
      %p75 = scmp.eq.s32.totalorder %s20, 0
      %p76 = por %p74, %p75
      %p77 = scmp.ne.s32.totalorder %s63, %s64
      %p78 = scmp.eq.s32.totalorder %s21, 1
      %p79 = por %p77, %p78
      %p81 = scmp.ne.s32.totalorder %s64, %s80
      %p82 = scmp.eq.s32.totalorder %s21, 0
      %p83 = por %p81, %p82
      %s84 = ssub.s32 %s22, %s34
      %s85 = ssub.s32 %s23, %s30
      %s86 = sor.u32 %s84, %s85
      %p87 = scmp.eq.s32.totalorder %s86, 0
      %s89 = sadd.s32 %s88, 1
      %s90 = scalar_select %p87, %s88, %s89
      %p93 = pneg %p87
      %p94 = scmp.eq.s32.totalorder %s15, 1
      %p95 = por %p93, %p94
      %p96 = scmp.ne.s32.totalorder %s88, %s91
      %p97 = scmp.eq.s32.totalorder %s15, 0
      %p98 = por %p96, %p97
      %p99 = scmp.ne.s32.totalorder %s88, %s91
      %p100 = scmp.eq.s32.totalorder %s20, 1
      %p101 = por %p99, %p100
      %p102 = scmp.ne.s32.totalorder %s91, %s92
      %p103 = scmp.eq.s32.totalorder %s20, 0
      %p104 = por %p102, %p103
      %p105 = scmp.ne.s32.totalorder %s91, %s92
      %p106 = scmp.eq.s32.totalorder %s21, 1
      %p107 = por %p105, %p106
      %p109 = scmp.ne.s32.totalorder %s92, %s108
      %p110 = scmp.eq.s32.totalorder %s21, 0
      %p111 = por %p109, %p110
      %p112 = scmp.le.s32.totalorder 1, %s15
      %p113 = scmp.lt.s32.totalorder %s15, 3
      %p114 = pnand %p112, %p113
      %p115 = pneg %p114
      // Predicated region
      $region9: #{tpu_custom_call.1} parent=5 // pred_check
        _
      $region10: #{tpu_custom_call.1} parent=5 // pred_check_branch
        %117 = sbr.rel (%p114) target = $region12
      $region11: #{tpu_custom_call.1} parent=5 // pred_region
        %s118 = ssub.s32 %s15, 1
        // Predicated region
        $region13: #{tpu_custom_call.1} parent=11 // pred_check
          %p119 = pneg %p48
        $region14: #{tpu_custom_call.1} parent=11 // pred_check_branch
          %121 = sbr.rel (%p119) target = $region16
        $region15: #{tpu_custom_call.1} parent=11 // pred_region
          %s123 = ssub.s32 64, 64
          %124 = vsyncadd [#allocation3], %s123
          %s126 = sshll.u32 [#allocation2], 4
          %s127 = int_to_ptr.vmem [resolvable:$true] %s126
          %129 = dma.hbm_to_vmem [thread:$0]  %s0, 64, %s127, [#allocation3]
        $region16: #{tpu_custom_call.1} parent=11 // pred_fallthru
          _
      $region12: #{tpu_custom_call.1} parent=5 // pred_fallthru
        _
      %p130 = scmp.lt.s32.totalorder %s15, 2
      // Predicated region
      $region17: #{tpu_custom_call.1} parent=5 // pred_check
        %p131 = pneg %p130
      $region18: #{tpu_custom_call.1} parent=5 // pred_check_branch
        %133 = sbr.rel (%p131) target = $region20
      $region19: #{tpu_custom_call.1} parent=5 // pred_region
        // Predicated region
        $region21: #{tpu_custom_call.1} parent=19 // pred_check
          %p134 = pneg %p70
        $region22: #{tpu_custom_call.1} parent=19 // pred_check_branch
          %136 = sbr.rel (%p134) target = $region24
        $region23: #{tpu_custom_call.1} parent=19 // pred_region
          %s137 = sand.u32 %s60, 1
          %s138 = scalar_lea.sflag [#allocation6], %s137
          %s139 = sand.u32 %s60, 1
          %s140 = smul.addr %s139, 8
          %s141 = scalar_lea.vmem [#allocation5], %s140
          %s142 = smul.u32 2, %s23
          %s144 = ssub.s32 128, 128
          %145 = vsyncadd %s138, %s144
          %s146 = smul.addr %s22, 2
          %s147 = sadd.s32 %s142, %s146
          %s148 = smul.addr %s147, 64
          %s149 = scalar_lea.hbm %s1, %s148
          %s151 = sshll.u32 %s141, 4
          %s152 = int_to_ptr.vmem [resolvable:$true] %s151
          %154 = dma.hbm_to_vmem [thread:$0]  %s149, 128, %s152, %s138
        $region24: #{tpu_custom_call.1} parent=19 // pred_fallthru
          _
      $region20: #{tpu_custom_call.1} parent=5 // pred_fallthru
        _
      %p155 = scmp.le.s32.totalorder 1, %s15
      %p156 = scmp.lt.s32.totalorder %s15, 3
      %p157 = pnand %p155, %p156
      %p158 = pneg %p157
      // Predicated region
      $region25: #{tpu_custom_call.1} parent=5 // pred_check
        _
      $region26: #{tpu_custom_call.1} parent=5 // pred_check_branch
        %160 = sbr.rel (%p157) target = $region28
      $region27: #{tpu_custom_call.1} parent=5 // pred_region
        %s161 = ssub.s32 %s15, 1
        // Predicated region
        $region29: #{tpu_custom_call.1} parent=27 // pred_check
          %p162 = pneg %p48
        $region30: #{tpu_custom_call.1} parent=27 // pred_check_branch
          %164 = sbr.rel (%p162) target = $region32
        $region31: #{tpu_custom_call.1} parent=27 // pred_region
          %165 = dma.done [#allocation3], 64
        $region32: #{tpu_custom_call.1} parent=27 // pred_fallthru
          _
        %s166 = sand.u32 %s63, 1
        %s167 = scalar_lea.sflag [#allocation6], %s166
        %s168 = sand.u32 %s63, 1
        %s169 = smul.addr %s168, 8
        %s170 = scalar_lea.vmem [#allocation5], %s169
        // Predicated region
        $region33: #{tpu_custom_call.1} parent=27 // pred_check
          %p171 = pneg %p76
        $region34: #{tpu_custom_call.1} parent=27 // pred_check_branch
          %173 = sbr.rel (%p171) target = $region36
        $region35: #{tpu_custom_call.1} parent=27 // pred_region
          %174 = dma.done %s167, 128
        $region36: #{tpu_custom_call.1} parent=27 // pred_fallthru
          _
        %p175 = pneg %p48
        %p176 = pneg %p45
        %s177 = sand.u32 %s63, 1
        %s178 = scalar_lea.sflag [#allocation6], %s177
        %s179 = sand.u32 %s63, 1
        %s180 = smul.addr %s179, 8
        %s181 = scalar_lea.vmem [#allocation5], %s180
        %p182 = pneg %p76
        %p183 = pneg %p73
        %p184 = pneg %p104
        %p185 = pneg %p101
        %s186 = sand.u32 %s91, 1
        %s187 = scalar_lea.sflag [#allocation4], %s186
        %s188 = sand.u32 %s91, 1
        %s189 = smul.addr %s188, 8
        %s190 = scalar_lea.vmem [#allocation7], %s189
        %s191 = smul.u32 2, %s25
        %s192 = smul.u32 2, %s25
        %v193 = vld [vmem:[#allocation2] sm:$0xf]
        %v194 = vld [vmem:[%s170] sm:$0xff]
        %v196 = vcombine.high %v194, %v194
        %vm197 = vcmask 31744
        %v199 = vsel %vm197, %v193, 0
        %vm201 = vcmask 1043456
        %v202 = vsel %vm201, %v194, 0
        %v204 = vsel %vm201, %v196, 0
        %v206 = vand.u32 %v204, 4294901760
        %207 = vmatprep.subr.mxu0 %v206
        %v208 = vand.u32 %v202, 4294901760
        %209 = vmatpush1.msra.mxu0 %v208
        %210 = vmatprep.subr.mxu0 0.0
        %211 = vmatpush1.msra.mxu0 0.0
        %212 = vmatprep.subr.mxu0 0.0
        %213 = vmatpush1.msra.mxu0 0.0
        %214 = vmatprep.subr.mxu0 0.0
        %215 = vmatpush1.msra.mxu0 0.0
        %216 = vmatprep.subr.mxu0 0.0
        %217 = vmatpush1.msra.mxu0 0.0
        %218 = vmatprep.subr.mxu0 0.0
        %219 = vmatpush1.msra.mxu0 0.0
        %220 = vmatprep.subr.mxu0 0.0
        %221 = vmatpush1.msra.mxu0 0.0
        %222 = vmatprep.subr.mxu0 0.0
        %223 = vmatpush1.msra.mxu0 0.0
        %224 = vmatprep.subr.mxu0 0.0
        %225 = vmatpush1.msra.mxu0 0.0
        %226 = vmatprep.subr.mxu0 0.0
        %227 = vmatpush1.msra.mxu0 0.0
        %228 = vmatprep.subr.mxu0 0.0
        %229 = vmatpush1.msra.mxu0 0.0
        %230 = vmatprep.subr.mxu0 0.0
        %231 = vmatpush1.msra.mxu0 0.0
        %232 = vmatprep.subr.mxu0 0.0
        %233 = vmatpush1.msra.mxu0 0.0
        %234 = vmatprep.subr.mxu0 0.0
        %235 = vmatpush1.msra.mxu0 0.0
        %236 = vmatprep.subr.mxu0 0.0
        %237 = vmatpush1.msra.mxu0 0.0
        %238 = vmatprep.subr.mxu0 0.0
        %239 = vmatpush1.msra.mxu0 0.0
        %240 = vmatprep.subr.mxu0 0.0
        %241 = vmatpush1.msra.mxu0 0.0
        %242 = vmatprep.subr.mxu0 0.0
        %243 = vmatpush1.msra.mxu0 0.0
        %244 = vmatprep.subr.mxu0 0.0
        %245 = vmatpush1.msra.mxu0 0.0
        %246 = vmatprep.subr.mxu0 0.0
        %247 = vmatpush1.msra.mxu0 0.0
        %248 = vmatprep.subr.mxu0 0.0
        %249 = vmatpush1.msra.mxu0 0.0
        %250 = vmatprep.subr.mxu0 0.0
        %251 = vmatpush1.msra.mxu0 0.0
        %252 = vmatprep.subr.mxu0 0.0
        %253 = vmatpush1.msra.mxu0 0.0
        %254 = vmatprep.subr.mxu0 0.0
        %255 = vmatpush1.msra.mxu0 0.0
        %256 = vmatprep.subr.mxu0 0.0
        %257 = vmatpush1.msra.mxu0 0.0
        %258 = vmatprep.subr.mxu0 0.0
        %259 = vmatpush1.msra.mxu0 0.0
        %260 = vmatprep.subr.mxu0 0.0
        %261 = vmatpush1.msra.mxu0 0.0
        %262 = vmatprep.subr.mxu0 0.0
        %263 = vmatpush1.msra.mxu0 0.0
        %264 = vmatprep.subr.mxu0 0.0
        %265 = vmatpush1.msra.mxu0 0.0
        %266 = vmatprep.subr.mxu0 0.0
        %267 = vmatpush1.msra.mxu0 0.0
        %268 = vmatprep.subr.mxu0 0.0
        %269 = vmatpush1.msra.mxu0 0.0
        %270 = vmatprep.subr.mxu0 0.0
        %271 = vmatpush1.msra.mxu0 0.0
        %272 = vmatprep.mubr.f32.mxu0 0.0
        %v273 = vand.u32 %v199, 4294901760
        %v274 = vsub.f32 %v199, %v273
        %v275 = vand.u32 %v274, 4294901760
        %v276 = vsub.f32 %v274, %v275
        %v277 = vand.u32 %v276, 4294901760
        %278 = vmatmul.mubr.f32.gmra.mrb[0].mxu0 %v277
        %v279 = vpop.f32.mrb[0].mxu0
        %v280 = vadd.f32 0.0, %v279
        %v281 = vpop.f32.mrb[0].mxu0
        %v282 = vadd.f32 0.0, %v281
        %283 = vdwg.mxu0
        %v284 = vand.u32 %v204, 4294901760
        %v285 = vsub.f32 %v204, %v284
        %v286 = vand.u32 %v285, 4294901760
        %v287 = vsub.f32 %v285, %v286
        %v288 = vand.u32 %v287, 4294901760
        %289 = vmatprep.subr.mxu0 %v288
        %v290 = vand.u32 %v202, 4294901760
        %v291 = vsub.f32 %v202, %v290
        %v292 = vand.u32 %v291, 4294901760
        %v293 = vsub.f32 %v291, %v292
        %v294 = vand.u32 %v293, 4294901760
        %295 = vmatpush1.msra.mxu0 %v294
        %296 = vmatprep.subr.mxu0 0.0
        %297 = vmatpush1.msra.mxu0 0.0
        %298 = vmatprep.subr.mxu0 0.0
        %299 = vmatpush1.msra.mxu0 0.0
        %300 = vmatprep.subr.mxu0 0.0
        %301 = vmatpush1.msra.mxu0 0.0
        %302 = vmatprep.subr.mxu0 0.0
        %303 = vmatpush1.msra.mxu0 0.0
        %304 = vmatprep.subr.mxu0 0.0
        %305 = vmatpush1.msra.mxu0 0.0
        %306 = vmatprep.subr.mxu0 0.0
        %307 = vmatpush1.msra.mxu0 0.0
        %308 = vmatprep.subr.mxu0 0.0
        %309 = vmatpush1.msra.mxu0 0.0
        %310 = vmatprep.subr.mxu0 0.0
        %311 = vmatpush1.msra.mxu0 0.0
        %312 = vmatprep.subr.mxu0 0.0
        %313 = vmatpush1.msra.mxu0 0.0
        %314 = vmatprep.subr.mxu0 0.0
        %315 = vmatpush1.msra.mxu0 0.0
        %316 = vmatprep.subr.mxu0 0.0
        %317 = vmatpush1.msra.mxu0 0.0
        %318 = vmatprep.subr.mxu0 0.0
        %319 = vmatpush1.msra.mxu0 0.0
        %320 = vmatprep.subr.mxu0 0.0
        %321 = vmatpush1.msra.mxu0 0.0
        %322 = vmatprep.subr.mxu0 0.0
        %323 = vmatpush1.msra.mxu0 0.0
        %324 = vmatprep.subr.mxu0 0.0
        %325 = vmatpush1.msra.mxu0 0.0
        %326 = vmatprep.subr.mxu0 0.0
        %327 = vmatpush1.msra.mxu0 0.0
        %328 = vmatprep.subr.mxu0 0.0
        %329 = vmatpush1.msra.mxu0 0.0
        %330 = vmatprep.subr.mxu0 0.0
        %331 = vmatpush1.msra.mxu0 0.0
        %332 = vmatprep.subr.mxu0 0.0
        %333 = vmatpush1.msra.mxu0 0.0
        %334 = vmatprep.subr.mxu0 0.0
        %335 = vmatpush1.msra.mxu0 0.0
        %336 = vmatprep.subr.mxu0 0.0
        %337 = vmatpush1.msra.mxu0 0.0
        %338 = vmatprep.subr.mxu0 0.0
        %339 = vmatpush1.msra.mxu0 0.0
        %340 = vmatprep.subr.mxu0 0.0
        %341 = vmatpush1.msra.mxu0 0.0
        %342 = vmatprep.subr.mxu0 0.0
        %343 = vmatpush1.msra.mxu0 0.0
        %344 = vmatprep.subr.mxu0 0.0
        %345 = vmatpush1.msra.mxu0 0.0
        %346 = vmatprep.subr.mxu0 0.0
        %347 = vmatpush1.msra.mxu0 0.0
        %348 = vmatprep.subr.mxu0 0.0
        %349 = vmatpush1.msra.mxu0 0.0
        %350 = vmatprep.subr.mxu0 0.0
        %351 = vmatpush1.msra.mxu0 0.0
        %352 = vmatprep.subr.mxu0 0.0
        %353 = vmatpush1.msra.mxu0 0.0
        %354 = vmatprep.subr.mxu0 0.0
        %355 = vmatpush1.msra.mxu0 0.0
        %356 = vmatprep.subr.mxu0 0.0
        %357 = vmatpush1.msra.mxu0 0.0
        %358 = vmatprep.mubr.f32.mxu0 0.0
        %v359 = vand.u32 %v199, 4294901760
        %360 = vmatmul.mubr.f32.gmra.mrb[0].mxu0 %v359
        %v361 = vpop.f32.mrb[0].mxu0
        %v362 = vadd.f32 %v280, %v361
        %v363 = vpop.f32.mrb[0].mxu0
        %v364 = vadd.f32 %v282, %v363
        %365 = vdwg.mxu0
        %v366 = vand.u32 %v204, 4294901760
        %v367 = vsub.f32 %v204, %v366
        %368 = vmatprep.subr.mxu0 %v367
        %v369 = vand.u32 %v202, 4294901760
        %v370 = vsub.f32 %v202, %v369
        %371 = vmatpush1.msra.mxu0 %v370
        %372 = vmatprep.subr.mxu0 0.0
        %373 = vmatpush1.msra.mxu0 0.0
        %374 = vmatprep.subr.mxu0 0.0
        %375 = vmatpush1.msra.mxu0 0.0
        %376 = vmatprep.subr.mxu0 0.0
        %377 = vmatpush1.msra.mxu0 0.0
        %378 = vmatprep.subr.mxu0 0.0
        %379 = vmatpush1.msra.mxu0 0.0
        %380 = vmatprep.subr.mxu0 0.0
        %381 = vmatpush1.msra.mxu0 0.0
        %382 = vmatprep.subr.mxu0 0.0
        %383 = vmatpush1.msra.mxu0 0.0
        %384 = vmatprep.subr.mxu0 0.0
        %385 = vmatpush1.msra.mxu0 0.0
        %386 = vmatprep.subr.mxu0 0.0
        %387 = vmatpush1.msra.mxu0 0.0
        %388 = vmatprep.subr.mxu0 0.0
        %389 = vmatpush1.msra.mxu0 0.0
        %390 = vmatprep.subr.mxu0 0.0
        %391 = vmatpush1.msra.mxu0 0.0
        %392 = vmatprep.subr.mxu0 0.0
        %393 = vmatpush1.msra.mxu0 0.0
        %394 = vmatprep.subr.mxu0 0.0
        %395 = vmatpush1.msra.mxu0 0.0
        %396 = vmatprep.subr.mxu0 0.0
        %397 = vmatpush1.msra.mxu0 0.0
        %398 = vmatprep.subr.mxu0 0.0
        %399 = vmatpush1.msra.mxu0 0.0
        %400 = vmatprep.subr.mxu0 0.0
        %401 = vmatpush1.msra.mxu0 0.0
        %402 = vmatprep.subr.mxu0 0.0
        %403 = vmatpush1.msra.mxu0 0.0
        %404 = vmatprep.subr.mxu0 0.0
        %405 = vmatpush1.msra.mxu0 0.0
        %406 = vmatprep.subr.mxu0 0.0
        %407 = vmatpush1.msra.mxu0 0.0
        %408 = vmatprep.subr.mxu0 0.0
        %409 = vmatpush1.msra.mxu0 0.0
        %410 = vmatprep.subr.mxu0 0.0
        %411 = vmatpush1.msra.mxu0 0.0
        %412 = vmatprep.subr.mxu0 0.0
        %413 = vmatpush1.msra.mxu0 0.0
        %414 = vmatprep.subr.mxu0 0.0
        %415 = vmatpush1.msra.mxu0 0.0
        %416 = vmatprep.subr.mxu0 0.0
        %417 = vmatpush1.msra.mxu0 0.0
        %418 = vmatprep.subr.mxu0 0.0
        %419 = vmatpush1.msra.mxu0 0.0
        %420 = vmatprep.subr.mxu0 0.0
        %421 = vmatpush1.msra.mxu0 0.0
        %422 = vmatprep.subr.mxu0 0.0
        %423 = vmatpush1.msra.mxu0 0.0
        %424 = vmatprep.subr.mxu0 0.0
        %425 = vmatpush1.msra.mxu0 0.0
        %426 = vmatprep.subr.mxu0 0.0
        %427 = vmatpush1.msra.mxu0 0.0
        %428 = vmatprep.subr.mxu0 0.0
        %429 = vmatpush1.msra.mxu0 0.0
        %430 = vmatprep.subr.mxu0 0.0
        %431 = vmatpush1.msra.mxu0 0.0
        %432 = vmatprep.subr.mxu0 0.0
        %433 = vmatpush1.msra.mxu0 0.0
        %434 = vmatprep.mubr.f32.mxu0 0.0
        %v435 = vand.u32 %v199, 4294901760
        %v436 = vsub.f32 %v199, %v435
        %437 = vmatmul.mubr.f32.gmra.mrb[0].mxu0 %v436
        %v438 = vpop.f32.mrb[0].mxu0
        %v439 = vadd.f32 %v362, %v438
        %v440 = vpop.f32.mrb[0].mxu0
        %v441 = vadd.f32 %v364, %v440
        %442 = vdwg.mxu0
        %v443 = vand.u32 %v204, 4294901760
        %444 = vmatprep.subr.mxu0 %v443
        %v445 = vand.u32 %v202, 4294901760
        %446 = vmatpush1.msra.mxu0 %v445
        %447 = vmatprep.subr.mxu0 0.0
        %448 = vmatpush1.msra.mxu0 0.0
        %449 = vmatprep.subr.mxu0 0.0
        %450 = vmatpush1.msra.mxu0 0.0
        %451 = vmatprep.subr.mxu0 0.0
        %452 = vmatpush1.msra.mxu0 0.0
        %453 = vmatprep.subr.mxu0 0.0
        %454 = vmatpush1.msra.mxu0 0.0
        %455 = vmatprep.subr.mxu0 0.0
        %456 = vmatpush1.msra.mxu0 0.0
        %457 = vmatprep.subr.mxu0 0.0
        %458 = vmatpush1.msra.mxu0 0.0
        %459 = vmatprep.subr.mxu0 0.0
        %460 = vmatpush1.msra.mxu0 0.0
        %461 = vmatprep.subr.mxu0 0.0
        %462 = vmatpush1.msra.mxu0 0.0
        %463 = vmatprep.subr.mxu0 0.0
        %464 = vmatpush1.msra.mxu0 0.0
        %465 = vmatprep.subr.mxu0 0.0
        %466 = vmatpush1.msra.mxu0 0.0
        %467 = vmatprep.subr.mxu0 0.0
        %468 = vmatpush1.msra.mxu0 0.0
        %469 = vmatprep.subr.mxu0 0.0
        %470 = vmatpush1.msra.mxu0 0.0
        %471 = vmatprep.subr.mxu0 0.0
        %472 = vmatpush1.msra.mxu0 0.0
        %473 = vmatprep.subr.mxu0 0.0
        %474 = vmatpush1.msra.mxu0 0.0
        %475 = vmatprep.subr.mxu0 0.0
        %476 = vmatpush1.msra.mxu0 0.0
        %477 = vmatprep.subr.mxu0 0.0
        %478 = vmatpush1.msra.mxu0 0.0
        %479 = vmatprep.subr.mxu0 0.0
        %480 = vmatpush1.msra.mxu0 0.0
        %481 = vmatprep.subr.mxu0 0.0
        %482 = vmatpush1.msra.mxu0 0.0
        %483 = vmatprep.subr.mxu0 0.0
        %484 = vmatpush1.msra.mxu0 0.0
        %485 = vmatprep.subr.mxu0 0.0
        %486 = vmatpush1.msra.mxu0 0.0
        %487 = vmatprep.subr.mxu0 0.0
        %488 = vmatpush1.msra.mxu0 0.0
        %489 = vmatprep.subr.mxu0 0.0
        %490 = vmatpush1.msra.mxu0 0.0
        %491 = vmatprep.subr.mxu0 0.0
        %492 = vmatpush1.msra.mxu0 0.0
        %493 = vmatprep.subr.mxu0 0.0
        %494 = vmatpush1.msra.mxu0 0.0
        %495 = vmatprep.subr.mxu0 0.0
        %496 = vmatpush1.msra.mxu0 0.0
        %497 = vmatprep.subr.mxu0 0.0
        %498 = vmatpush1.msra.mxu0 0.0
        %499 = vmatprep.subr.mxu0 0.0
        %500 = vmatpush1.msra.mxu0 0.0
        %501 = vmatprep.subr.mxu0 0.0
        %502 = vmatpush1.msra.mxu0 0.0
        %503 = vmatprep.subr.mxu0 0.0
        %504 = vmatpush1.msra.mxu0 0.0
        %505 = vmatprep.subr.mxu0 0.0
        %506 = vmatpush1.msra.mxu0 0.0
        %507 = vmatprep.subr.mxu0 0.0
        %508 = vmatpush1.msra.mxu0 0.0
        %509 = vmatprep.mubr.f32.mxu0 0.0
        %v510 = vand.u32 %v199, 4294901760
        %v511 = vsub.f32 %v199, %v510
        %v512 = vand.u32 %v511, 4294901760
        %513 = vmatmul.mubr.f32.gmra.mrb[0].mxu0 %v512
        %v514 = vpop.f32.mrb[0].mxu0
        %v515 = vadd.f32 %v439, %v514
        %v516 = vpop.f32.mrb[0].mxu0
        %v517 = vadd.f32 %v441, %v516
        %518 = vdwg.mxu0
        %v519 = vand.u32 %v204, 4294901760
        %v520 = vsub.f32 %v204, %v519
        %v521 = vand.u32 %v520, 4294901760
        %522 = vmatprep.subr.mxu0 %v521
        %v523 = vand.u32 %v202, 4294901760
        %v524 = vsub.f32 %v202, %v523
        %v525 = vand.u32 %v524, 4294901760
        %526 = vmatpush1.msra.mxu0 %v525
        %527 = vmatprep.subr.mxu0 0.0
        %528 = vmatpush1.msra.mxu0 0.0
        %529 = vmatprep.subr.mxu0 0.0
        %530 = vmatpush1.msra.mxu0 0.0
        %531 = vmatprep.subr.mxu0 0.0
        %532 = vmatpush1.msra.mxu0 0.0
        %533 = vmatprep.subr.mxu0 0.0
        %534 = vmatpush1.msra.mxu0 0.0
        %535 = vmatprep.subr.mxu0 0.0
        %536 = vmatpush1.msra.mxu0 0.0
        %537 = vmatprep.subr.mxu0 0.0
        %538 = vmatpush1.msra.mxu0 0.0
        %539 = vmatprep.subr.mxu0 0.0
        %540 = vmatpush1.msra.mxu0 0.0
        %541 = vmatprep.subr.mxu0 0.0
        %542 = vmatpush1.msra.mxu0 0.0
        %543 = vmatprep.subr.mxu0 0.0
        %544 = vmatpush1.msra.mxu0 0.0
        %545 = vmatprep.subr.mxu0 0.0
        %546 = vmatpush1.msra.mxu0 0.0
        %547 = vmatprep.subr.mxu0 0.0
        %548 = vmatpush1.msra.mxu0 0.0
        %549 = vmatprep.subr.mxu0 0.0
        %550 = vmatpush1.msra.mxu0 0.0
        %551 = vmatprep.subr.mxu0 0.0
        %552 = vmatpush1.msra.mxu0 0.0
        %553 = vmatprep.subr.mxu0 0.0
        %554 = vmatpush1.msra.mxu0 0.0
        %555 = vmatprep.subr.mxu0 0.0
        %556 = vmatpush1.msra.mxu0 0.0
        %557 = vmatprep.subr.mxu0 0.0
        %558 = vmatpush1.msra.mxu0 0.0
        %559 = vmatprep.subr.mxu0 0.0
        %560 = vmatpush1.msra.mxu0 0.0
        %561 = vmatprep.subr.mxu0 0.0
        %562 = vmatpush1.msra.mxu0 0.0
        %563 = vmatprep.subr.mxu0 0.0
        %564 = vmatpush1.msra.mxu0 0.0
        %565 = vmatprep.subr.mxu0 0.0
        %566 = vmatpush1.msra.mxu0 0.0
        %567 = vmatprep.subr.mxu0 0.0
        %568 = vmatpush1.msra.mxu0 0.0
        %569 = vmatprep.subr.mxu0 0.0
        %570 = vmatpush1.msra.mxu0 0.0
        %571 = vmatprep.subr.mxu0 0.0
        %572 = vmatpush1.msra.mxu0 0.0
        %573 = vmatprep.subr.mxu0 0.0
        %574 = vmatpush1.msra.mxu0 0.0
        %575 = vmatprep.subr.mxu0 0.0
        %576 = vmatpush1.msra.mxu0 0.0
        %577 = vmatprep.subr.mxu0 0.0
        %578 = vmatpush1.msra.mxu0 0.0
        %579 = vmatprep.subr.mxu0 0.0
        %580 = vmatpush1.msra.mxu0 0.0
        %581 = vmatprep.subr.mxu0 0.0
        %582 = vmatpush1.msra.mxu0 0.0
        %583 = vmatprep.subr.mxu0 0.0
        %584 = vmatpush1.msra.mxu0 0.0
        %585 = vmatprep.subr.mxu0 0.0
        %586 = vmatpush1.msra.mxu0 0.0
        %587 = vmatprep.subr.mxu0 0.0
        %588 = vmatpush1.msra.mxu0 0.0
        %589 = vmatprep.mubr.f32.mxu0 0.0
        %v590 = vand.u32 %v199, 4294901760
        %591 = vmatmul.mubr.f32.gmra.mrb[0].mxu0 %v590
        %v592 = vpop.f32.mrb[0].mxu0
        %v593 = vadd.f32 %v515, %v592
        %v594 = vpop.f32.mrb[0].mxu0
        %v595 = vadd.f32 %v517, %v594
        %596 = vdwg.mxu0
        %v597 = vand.u32 %v204, 4294901760
        %598 = vmatprep.subr.mxu0 %v597
        %v599 = vand.u32 %v202, 4294901760
        %600 = vmatpush1.msra.mxu0 %v599
        %601 = vmatprep.subr.mxu0 0.0
        %602 = vmatpush1.msra.mxu0 0.0
        %603 = vmatprep.subr.mxu0 0.0
        %604 = vmatpush1.msra.mxu0 0.0
        %605 = vmatprep.subr.mxu0 0.0
        %606 = vmatpush1.msra.mxu0 0.0
        %607 = vmatprep.subr.mxu0 0.0
        %608 = vmatpush1.msra.mxu0 0.0
        %609 = vmatprep.subr.mxu0 0.0
        %610 = vmatpush1.msra.mxu0 0.0
        %611 = vmatprep.subr.mxu0 0.0
        %612 = vmatpush1.msra.mxu0 0.0
        %613 = vmatprep.subr.mxu0 0.0
        %614 = vmatpush1.msra.mxu0 0.0
        %615 = vmatprep.subr.mxu0 0.0
        %616 = vmatpush1.msra.mxu0 0.0
        %617 = vmatprep.subr.mxu0 0.0
        %618 = vmatpush1.msra.mxu0 0.0
        %619 = vmatprep.subr.mxu0 0.0
        %620 = vmatpush1.msra.mxu0 0.0
        %621 = vmatprep.subr.mxu0 0.0
        %622 = vmatpush1.msra.mxu0 0.0
        %623 = vmatprep.subr.mxu0 0.0
        %624 = vmatpush1.msra.mxu0 0.0
        %625 = vmatprep.subr.mxu0 0.0
        %626 = vmatpush1.msra.mxu0 0.0
        %627 = vmatprep.subr.mxu0 0.0
        %628 = vmatpush1.msra.mxu0 0.0
        %629 = vmatprep.subr.mxu0 0.0
        %630 = vmatpush1.msra.mxu0 0.0
        %631 = vmatprep.subr.mxu0 0.0
        %632 = vmatpush1.msra.mxu0 0.0
        %633 = vmatprep.subr.mxu0 0.0
        %634 = vmatpush1.msra.mxu0 0.0
        %635 = vmatprep.subr.mxu0 0.0
        %636 = vmatpush1.msra.mxu0 0.0
        %637 = vmatprep.subr.mxu0 0.0
        %638 = vmatpush1.msra.mxu0 0.0
        %639 = vmatprep.subr.mxu0 0.0
        %640 = vmatpush1.msra.mxu0 0.0
        %641 = vmatprep.subr.mxu0 0.0
        %642 = vmatpush1.msra.mxu0 0.0
        %643 = vmatprep.subr.mxu0 0.0
        %644 = vmatpush1.msra.mxu0 0.0
        %645 = vmatprep.subr.mxu0 0.0
        %646 = vmatpush1.msra.mxu0 0.0
        %647 = vmatprep.subr.mxu0 0.0
        %648 = vmatpush1.msra.mxu0 0.0
        %649 = vmatprep.subr.mxu0 0.0
        %650 = vmatpush1.msra.mxu0 0.0
        %651 = vmatprep.subr.mxu0 0.0
        %652 = vmatpush1.msra.mxu0 0.0
        %653 = vmatprep.subr.mxu0 0.0
        %654 = vmatpush1.msra.mxu0 0.0
        %655 = vmatprep.subr.mxu0 0.0
        %656 = vmatpush1.msra.mxu0 0.0
        %657 = vmatprep.subr.mxu0 0.0
        %658 = vmatpush1.msra.mxu0 0.0
        %659 = vmatprep.subr.mxu0 0.0
        %660 = vmatpush1.msra.mxu0 0.0
        %661 = vmatprep.subr.mxu0 0.0
        %662 = vmatpush1.msra.mxu0 0.0
        %663 = vmatprep.mubr.f32.mxu0 0.0
        %v664 = vand.u32 %v199, 4294901760
        %665 = vmatmul.mubr.f32.gmra.mrb[0].mxu0 %v664
        %v666 = vpop.f32.mrb[0].mxu0
        %v667 = vadd.f32 %v593, %v666
        %v668 = vpop.f32.mrb[0].mxu0
        %v669 = vadd.f32 %v595, %v668
        %670 = vdwg.mxu0
        %v673 = vcombine.low %v667, %v669
        %675 = vst [vmem:[%s190] sm:$0xff] %v673
        %s676 = sand.u32 %s91, 1
        %s677 = scalar_lea.sflag [#allocation4], %s676
        %s678 = sand.u32 %s91, 1
        %s679 = smul.addr %s678, 8
        %s680 = scalar_lea.vmem [#allocation7], %s679
        // Predicated region
        $region37: #{tpu_custom_call.1} parent=27 // pred_check
          %p681 = pneg %p101
        $region38: #{tpu_custom_call.1} parent=27 // pred_check_branch
          %683 = sbr.rel (%p681) target = $region40
        $region39: #{tpu_custom_call.1} parent=27 // pred_region
          %s684 = smul.u32 2, %s25
          %s686 = ssub.s32 128, 128
          %687 = vsyncadd %s677, %s686
          %s688 = smul.addr %s24, 2
          %s689 = sadd.s32 %s684, %s688
          %s690 = smul.addr %s689, 64
          %s691 = scalar_lea.hbm %s2, %s690
          %s693 = sshll.u32 %s680, 4
          %s694 = int_to_ptr.vmem [resolvable:$true] %s693
          %696 = dma.vmem_to_hbm [thread:$0]  %s694, 128, %s691, %s677
        $region40: #{tpu_custom_call.1} parent=27 // pred_fallthru
          _
      $region28: #{tpu_custom_call.1} parent=5 // pred_fallthru
        _
      %p697 = scmp.le.s32.totalorder 2, %s15
      // Predicated region
      $region41: #{tpu_custom_call.1} parent=5 // pred_check
        %p698 = pneg %p697
      $region42: #{tpu_custom_call.1} parent=5 // pred_check_branch
        %700 = sbr.rel (%p698) target = $region44
      $region43: #{tpu_custom_call.1} parent=5 // pred_region
        %s701 = ssub.s32 %s15, 2
        // Predicated region
        $region45: #{tpu_custom_call.1} parent=43 // pred_check
          %p702 = pneg %p107
        $region46: #{tpu_custom_call.1} parent=43 // pred_check_branch
          %704 = sbr.rel (%p702) target = $region48
        $region47: #{tpu_custom_call.1} parent=43 // pred_region
          %s705 = sand.u32 %s92, 1
          %s706 = scalar_lea.sflag [#allocation4], %s705
          %s707 = sand.u32 %s92, 1
          %s708 = smul.addr %s707, 8
          %s709 = scalar_lea.vmem [#allocation7], %s708
          %710 = dma.done %s706, 128
        $region48: #{tpu_custom_call.1} parent=43 // pred_fallthru
          _
      $region44: #{tpu_custom_call.1} parent=5 // pred_fallthru
        _
    $region6: #{tpu_custom_call.1} parent=1 // loop_footer
      %s19 = sadd.s32 1, %s15
    $region7: #{tpu_custom_call.1} parent=1 // loop_footer_branch
      %14 = sbr.rel target = $region3
    $region8: #{tpu_custom_call.1} parent=1 // loop_exit
      _
    %711 = vsyncpa [#allocation3], 1
    %s712 = scalar_lea.sflag [#allocation3], 1
    %713 = vsyncpa %s712, 1
    %714 = vsyncpa [#allocation6], 1
    %s715 = scalar_lea.sflag [#allocation6], 1
    %716 = vsyncpa %s715, 1
    %717 = vsyncpa [#allocation4], 1
    %s718 = scalar_lea.sflag [#allocation4], 1
    %719 = vsyncpa %s718, 1

</llo_original>
